<compile_context>
chip_gen: v7x
topology: tpu7x:2x2x1
jax: 0.10.0
libtpu: 0.0.40
codegen_flags: <defaults>
</compile_context>

<pallas_src>
import jax
import jax.numpy as jnp
from jax import lax
from jax.experimental import pallas as pl
from jax.experimental.pallas import tpu as pltpu

# TODO(synk): `self.model` is an arbitrary wrapped submodule; treated as identity
# here (any JAX backbone can be applied before calling global_branch).
# TODO(synk): BatchNorm2d is implemented in training mode (batch statistics,
# biased variance, gamma=1, beta=0); eval mode would require running_mean /
# running_var / affine parameters as extra inputs.

CLAMP_EPS = 1e-6      # self.eps
BN_EPS    = 1e-5      # nn.BatchNorm2d default eps
POW       = 3.0       # self.p
BN_GAMMA  = 1.0       # nn.init.constant_(weight, 1)
BN_BETA   = 0.0       # nn.init.constant_(bias, 0)

_VMEM_LIMIT_BYTES  = 32 * 1024 * 1024   # >= default scoped limit on v5e/v6e/v7x
_TILE_BUDGET_BYTES = 16 * 1024 * 1024   # (x+out+norm+vis) tiles x 2 pipeline buffers
_MAX_HW_TILE       = 4096               # lane-tile cap (multiple of 128)


def _pow_p(x, p):
    """x**p for positive x; repeated multiply when p is a small positive integer
    so the power and the later 1/p root can never silently disagree."""
    if float(p).is_integer() and 1 <= p <= 8:
        acc = x
        for _ in range(int(p) - 1):
            acc = acc * x
        return acc
    return jnp.exp(jnp.log(x) * p)


def _pnorm_kernel(x_ref, norm_ref):
    # x_ref: (C, hw_tile) in input dtype; norm_ref: (1, hw_tile) f32.
    x = x_ref[...].astype(jnp.float32)
    xc = jnp.maximum(x, CLAMP_EPS)                       # clamp(min=eps)
    xp = _pow_p(xc, POW)                                 # pow(p)
    s = jnp.sum(xp, axis=0, keepdims=True)               # channel reduce (sublanes)
    norm_ref[...] = jnp.exp(jnp.log(s) * (1.0 / POW))    # pow(1/p); s > 0 by clamp


def _apply_kernel(stats_ref, x_ref, norm_ref, out_ref, vis_ref):
    # stats_ref: (2,) f32 in SMEM = [scale, shift] with
    #   scale = gamma / sqrt(var + eps),  shift = beta - mean * scale
    # x_ref/out_ref: (C, hw_tile); norm_ref/vis_ref: (1, hw_tile).
    scale = stats_ref[0]
    shift = stats_ref[1]
    gate = jax.nn.sigmoid(norm_ref[...] * scale + shift)              # (1, hw_tile) f32
    vis_ref[...] = gate.astype(vis_ref.dtype)
    out_ref[...] = (x_ref[...].astype(jnp.float32) * gate).astype(out_ref.dtype)


def _pick_hw_tile(C, HW, itemsize):
    """Largest lane tile (multiple of 128) whose double-buffered working set
    (x + out + norm + vis tiles) fits the VMEM budget on all generations."""
    per_lane = 2 * (2 * C * itemsize + 4 + itemsize)   # x + out + f32 norm + vis, x2 buffers
    tile = _TILE_BUDGET_BYTES // max(per_lane, 1)
    tile = max(128, (tile // 128) * 128)
    tile = min(tile, _MAX_HW_TILE)
    hw_pad128 = ((HW + 127) // 128) * 128
    return min(tile, hw_pad128)


@jax.jit
def global_branch(x_nchw):
    """x_nchw: (N, C, H, W) -> (out (N,C,H,W), vis_global (N,1,H,W))."""
    N, C, H, W = x_nchw.shape
    HW = H * W
    dtype = x_nchw.dtype
    itemsize = jnp.dtype(dtype).itemsize

    hw_tile = _pick_hw_tile(C, HW, itemsize)
    HW_pad = ((HW + hw_tile - 1) // hw_tile) * hw_tile
    T = HW_pad // hw_tile

    # Free, contiguous reshape — no transpose, no extra HBM round trip.
    x3 = x_nchw.reshape(N, C, HW)
    if HW_pad != HW:
        x3 = jnp.pad(x3, ((0, 0), (0, 0), (0, HW_pad - HW)))

    cparams = pltpu.CompilerParams(
        dimension_semantics=("parallel", "parallel"),
        vmem_limit_bytes=_VMEM_LIMIT_BYTES,
    )

    # ---- Pass 1: per-pixel channel p-norm (streams x once, writes 1/C-sized norm).
    norm = pl.pallas_call(
        _pnorm_kernel,
        out_shape=jax.ShapeDtypeStruct((N, 1, HW_pad), jnp.float32),
        grid=(N, T),
        in_specs=[pl.BlockSpec((None, C, hw_tile), lambda n, t: (n, 0, t))],
        out_specs=pl.BlockSpec((None, 1, hw_tile), lambda n, t: (n, 0, t)),
        compiler_params=cparams,
    )(x3)

    # ---- BatchNorm2d(1) training-mode batch stats over all valid N*H*W pixels
    # (tiny reduce over the 1/C-sized norm map; padded columns excluded).
    norm_valid = norm[:, :, :HW] if HW_pad != HW else norm
    mean = jnp.mean(norm_valid)
    var = jnp.mean(jnp.square(norm_valid - mean))        # biased variance (PyTorch train)
    scale = BN_GAMMA * lax.rsqrt(var + BN_EPS)
    shift = BN_BETA - mean * scale
    stats = jnp.stack([scale, shift]).astype(jnp.float32)  # (2,) -> SMEM scalars

    # ---- Pass 2: gate = sigmoid(BN(norm)); out = x * gate.  x aliased to out.
    out3, vis3 = pl.pallas_call(
        _apply_kernel,
        out_shape=(
            jax.ShapeDtypeStruct((N, C, HW_pad), dtype),
            jax.ShapeDtypeStruct((N, 1, HW_pad), dtype),
        ),
        grid=(N, T),
        in_specs=[
            pl.BlockSpec(memory_space=pltpu.MemorySpace.SMEM),            # stats
            pl.BlockSpec((None, C, hw_tile), lambda n, t: (n, 0, t)),     # x
            pl.BlockSpec((None, 1, hw_tile), lambda n, t: (n, 0, t)),     # norm
        ],
        out_specs=(
            pl.BlockSpec((None, C, hw_tile), lambda n, t: (n, 0, t)),     # out
            pl.BlockSpec((None, 1, hw_tile), lambda n, t: (n, 0, t)),     # vis
        ),
        input_output_aliases={1: 0},   # x buffer reused for out (same shape/dtype)
        compiler_params=cparams,
    )(stats, x3, norm)

    if HW_pad != HW:
        out3 = out3[:, :, :HW]
        vis3 = vis3[:, :, :HW]
    out = out3.reshape(N, C, H, W)
    vis = vis3.reshape(N, 1, H, W)
    return out, vis


def _reference(x_nchw):
    """Plain-JAX reference mirroring the PyTorch forward (training-mode BN)."""
    x = x_nchw.astype(jnp.float32)
    norm = jnp.sum(jnp.clip(x, CLAMP_EPS, None) ** POW, axis=1, keepdims=True) ** (1.0 / POW)
    mean = jnp.mean(norm)
    var = jnp.mean((norm - mean) ** 2)
    bn = (norm - mean) / jnp.sqrt(var + BN_EPS) * BN_GAMMA + BN_BETA
    gate = jax.nn.sigmoid(bn)
    return x * gate, gate


if __name__ == "__main__":
    key = jax.random.PRNGKey(0)
    x = jax.random.normal(key, (2, 4, 16, 16), dtype=jnp.float32)

    out, vis = global_branch(x)
    out = jax.block_until_ready(out)
    vis = jax.block_until_ready(vis)

    ref_out, ref_vis = _reference(x)
    assert out.shape == (2, 4, 16, 16)
    assert vis.shape == (2, 1, 16, 16)
    assert jnp.allclose(out, ref_out, atol=1e-4, rtol=1e-4)
    assert jnp.allclose(vis, ref_vis, atol=1e-4, rtol=1e-4)

    print("KERNEL_OK")
</pallas_src>

<mosaic_0001>
module attributes {stable_mosaic.version = 11 : i64} {
  func.func @_pnorm_kernel(%arg0: i32, %arg1: i32, %arg2: memref<1x4x256xf32, #tpu.memory_space<vmem>>, %arg3: memref<1x1x256xf32, #tpu.memory_space<vmem>>) attributes {dimension_semantics = [#tpu.dimension_semantics<parallel>, #tpu.dimension_semantics<parallel>], iteration_bounds = array<i64: 2, 1>, scalar_prefetch = 0 : i64, scratch_operands = 0 : i64, tpu.core_type = #tpu.core_type<tc>, window_params = [{transform_indices = @transform_0, window_bounds = array<i64: 1, 4, 256>}, {transform_indices = @transform_1, window_bounds = array<i64: 1, 1, 256>}]} {
    %c0 = arith.constant 0 : index
    %c0_0 = arith.constant 0 : index
    %c0_1 = arith.constant 0 : index
    %0 = vector.load %arg2[%c0, %c0_0, %c0_1] : memref<1x4x256xf32, #tpu.memory_space<vmem>>, vector<1x4x256xf32>
    %1 = vector.shape_cast %0 : vector<1x4x256xf32> to vector<4x256xf32>
    %cst = arith.constant 9.99999997E-7 : f32
    %2 = vector.broadcast %cst : f32 to vector<4x256xf32>
    %3 = arith.maximumf %1, %2 : vector<4x256xf32>
    %4 = arith.mulf %3, %3 : vector<4x256xf32>
    %5 = arith.mulf %4, %3 : vector<4x256xf32>
    %cst_2 = arith.constant dense<0.000000e+00> : vector<256xf32>
    %6 = vector.multi_reduction <add>, %5, %cst_2 [0] : vector<4x256xf32> to vector<256xf32>
    %7 = vector.shape_cast %6 : vector<256xf32> to vector<1x256xf32>
    %8 = math.log %7 : vector<1x256xf32>
    %cst_3 = arith.constant 0.333333343 : f32
    %9 = vector.broadcast %cst_3 : f32 to vector<1x256xf32>
    %10 = arith.mulf %8, %9 : vector<1x256xf32>
    %11 = math.exp %10 : vector<1x256xf32>
    %c0_4 = arith.constant 0 : index
    %c0_5 = arith.constant 0 : index
    %c0_6 = arith.constant 0 : index
    %12 = vector.load %arg3[%c0_4, %c0_5, %c0_6] : memref<1x1x256xf32, #tpu.memory_space<vmem>>, vector<1x1x256xf32>
    %13 = vector.shape_cast %12 : vector<1x1x256xf32> to vector<1x256xf32>
    %14 = vector.shape_cast %11 : vector<1x256xf32> to vector<1x1x256xf32>
    tpu.vector_store %arg3[%c0_4, %c0_5, %c0_6], %14 {strides = array<i32>} : memref<1x1x256xf32, #tpu.memory_space<vmem>>, vector<1x1x256xf32>,
    return
  }
  func.func @transform_0(%arg0: i32, %arg1: i32) -> (i32, i32, i32) {
    %c0_i32 = arith.constant 0 : i32
    %c0_i32_0 = arith.constant 0 : i32
    return %arg0, %c0_i32, %arg1 : i32, i32, i32
  }
  func.func @transform_1(%arg0: i32, %arg1: i32) -> (i32, i32, i32) {
    %c0_i32 = arith.constant 0 : i32
    %c0_i32_0 = arith.constant 0 : i32
    return %arg0, %c0_i32, %arg1 : i32, i32, i32
  }
}

module attributes {stable_mosaic.version = 11 : i64} {
  func.func @_apply_kernel(%arg0: i32, %arg1: i32, %arg2: memref<2xf32, #tpu.memory_space<smem>>, %arg3: memref<1x4x256xf32, #tpu.memory_space<vmem>>, %arg4: memref<1x1x256xf32, #tpu.memory_space<vmem>>, %arg5: memref<1x4x256xf32, #tpu.memory_space<vmem>>, %arg6: memref<1x1x256xf32, #tpu.memory_space<vmem>>) attributes {dimension_semantics = [#tpu.dimension_semantics<parallel>, #tpu.dimension_semantics<parallel>], iteration_bounds = array<i64: 2, 1>, scalar_prefetch = 0 : i64, scratch_operands = 0 : i64, tpu.core_type = #tpu.core_type<tc>, window_params = [{transform_indices = @transform_0, window_bounds = array<i64: 2>}, {transform_indices = @transform_1, window_bounds = array<i64: 1, 4, 256>}, {transform_indices = @transform_2, window_bounds = array<i64: 1, 1, 256>}, {transform_indices = @transform_3, window_bounds = array<i64: 1, 4, 256>}, {transform_indices = @transform_4, window_bounds = array<i64: 1, 1, 256>}]} {
    %c0 = arith.constant 0 : index
    %0 = memref.load %arg2[%c0] : memref<2xf32, #tpu.memory_space<smem>>
    %c1 = arith.constant 1 : index
    %1 = memref.load %arg2[%c1] : memref<2xf32, #tpu.memory_space<smem>>
    %c0_0 = arith.constant 0 : index
    %c0_1 = arith.constant 0 : index
    %c0_2 = arith.constant 0 : index
    %2 = vector.load %arg4[%c0_0, %c0_1, %c0_2] : memref<1x1x256xf32, #tpu.memory_space<vmem>>, vector<1x1x256xf32>
    %3 = vector.shape_cast %2 : vector<1x1x256xf32> to vector<1x256xf32>
    %4 = vector.broadcast %0 : f32 to vector<1x256xf32>
    %5 = arith.mulf %3, %4 : vector<1x256xf32>
    %6 = vector.broadcast %1 : f32 to vector<1x256xf32>
    %7 = arith.addf %5, %6 : vector<1x256xf32>
    %8 = arith.negf %7 : vector<1x256xf32>
    %9 = math.exp %8 : vector<1x256xf32>
    %cst = arith.constant 1.000000e+00 : f32
    %10 = vector.broadcast %cst : f32 to vector<1x256xf32>
    %11 = arith.addf %10, %9 : vector<1x256xf32>
    %12 = arith.divf %10, %11 : vector<1x256xf32>
    %c0_3 = arith.constant 0 : index
    %c0_4 = arith.constant 0 : index
    %c0_5 = arith.constant 0 : index
    %13 = vector.load %arg6[%c0_3, %c0_4, %c0_5] : memref<1x1x256xf32, #tpu.memory_space<vmem>>, vector<1x1x256xf32>
    %14 = vector.shape_cast %13 : vector<1x1x256xf32> to vector<1x256xf32>
    %15 = vector.shape_cast %12 : vector<1x256xf32> to vector<1x1x256xf32>
    tpu.vector_store %arg6[%c0_3, %c0_4, %c0_5], %15 {strides = array<i32>} : memref<1x1x256xf32, #tpu.memory_space<vmem>>, vector<1x1x256xf32>,
    %c0_6 = arith.constant 0 : index
    %c0_7 = arith.constant 0 : index
    %c0_8 = arith.constant 0 : index
    %16 = vector.load %arg3[%c0_6, %c0_7, %c0_8] : memref<1x4x256xf32, #tpu.memory_space<vmem>>, vector<1x4x256xf32>
    %17 = vector.shape_cast %16 : vector<1x4x256xf32> to vector<4x256xf32>
    %18 = vector.broadcast %12 : vector<1x256xf32> to vector<4x256xf32>
    %19 = arith.mulf %17, %18 : vector<4x256xf32>
    %c0_9 = arith.constant 0 : index
    %c0_10 = arith.constant 0 : index
    %c0_11 = arith.constant 0 : index
    %20 = vector.load %arg5[%c0_9, %c0_10, %c0_11] : memref<1x4x256xf32, #tpu.memory_space<vmem>>, vector<1x4x256xf32>
    %21 = vector.shape_cast %20 : vector<1x4x256xf32> to vector<4x256xf32>
    %22 = vector.shape_cast %19 : vector<4x256xf32> to vector<1x4x256xf32>
    tpu.vector_store %arg5[%c0_9, %c0_10, %c0_11], %22 {strides = array<i32>} : memref<1x4x256xf32, #tpu.memory_space<vmem>>, vector<1x4x256xf32>,
    return
  }
  func.func @transform_0(%arg0: i32, %arg1: i32) -> i32 {
    %c0_i32 = arith.constant 0 : i32
    %c0_i32_0 = arith.constant 0 : i32
    return %c0_i32 : i32
  }
  func.func @transform_1(%arg0: i32, %arg1: i32) -> (i32, i32, i32) {
    %c0_i32 = arith.constant 0 : i32
    %c0_i32_0 = arith.constant 0 : i32
    return %arg0, %c0_i32, %arg1 : i32, i32, i32
  }
  func.func @transform_2(%arg0: i32, %arg1: i32) -> (i32, i32, i32) {
    %c0_i32 = arith.constant 0 : i32
    %c0_i32_0 = arith.constant 0 : i32
    return %arg0, %c0_i32, %arg1 : i32, i32, i32
  }
  func.func @transform_3(%arg0: i32, %arg1: i32) -> (i32, i32, i32) {
    %c0_i32 = arith.constant 0 : i32
    %c0_i32_0 = arith.constant 0 : i32
    return %arg0, %c0_i32, %arg1 : i32, i32, i32
  }
  func.func @transform_4(%arg0: i32, %arg1: i32) -> (i32, i32, i32) {
    %c0_i32 = arith.constant 0 : i32
    %c0_i32_0 = arith.constant 0 : i32
    return %arg0, %c0_i32, %arg1 : i32, i32, i32
  }
}

</mosaic_0001>

<llo_original>
// kernel: global_branch.2
$region0: #{global_branch.2}
  #allocation0 [shape = 'u32[]', space=smem, size = 0x4, offset = 0x4, fixed_abs, tag = 'smem constant byte address 0x4 - core index']
  #allocation1 [shape = 'u32[144,128]{1,0:T(1,128)}', space=vmem, size = 0x12000, scoped, tag = 'internal scratch']
  %s0 = inlined_call_operand.vmem [shape: f32[2,4,256], index: 0, kind: input, shape index: {}]
  %s1 = inlined_call_operand.vmem [shape: f32[2,1,256], index: 1, kind: output, shape index: {}]
  %s2 = sld [smem:[#allocation0]]
  $region37: #{global_branch.2} parent=0
    _
  %s4 = ssub.s32 1, %s2
  %s5 = scalar_select 0, %s4, %s2
  loop: start=0, step=1, limit=4
  $region2: #{global_branch.2} parent=0 // loop_pre_header
    _
  $region3: #{global_branch.2} parent=0 // loop_header
    %s7 = sphi 0, %s11
    %p8 = scmp.ge.s32.totalorder %s7, 4
    %s14 = sphi 0, %s26
    %s15 = sphi 0, %s22
    %s16 = sphi 0, %s14
    %s17 = sphi 0, %s15
    %s18 = sphi 0, %s16
    %s19 = sphi 0, %s17
    %s31 = sphi 0, %s33
    %s34 = sphi 0, %s31
    %s35 = sphi 0, %s34
    %s51 = sphi 0, %s35
    %s59 = sphi 0, %s61
    %s62 = sphi 0, %s59
    %s63 = sphi 0, %s62
    %s79 = sphi 0, %s63
  $region4: #{global_branch.2} parent=0 // loop_header_branch
    %10 = sbr.rel (%p8) target = $region8
  $region5: #{global_branch.2} parent=0 // loop_body
    %s12 = ssub.s32 %s7, 1
    %s13 = ssub.s32 %s7, 2
    %s20 = sadd.s32 1, %s15
    %p21 = scmp.ge.s32.totalorder %s20, 1
    %s22 = scalar_select %p21, 0, %s20
    %s23 = sadd.s32 1, %s14
    %s24 = scalar_select %p21, %s23, %s14
    %p25 = scmp.ge.s32.totalorder %s24, 2
    %s26 = scalar_select %p25, 0, %s24
    %s27 = ssub.s32 %s14, %s26
    %s28 = ssub.s32 %s15, %s22
    %s29 = sor.u32 %s27, %s28
    %p30 = scmp.eq.s32.totalorder %s29, 0
    %s32 = sadd.s32 %s31, 1
    %s33 = scalar_select %p30, %s31, %s32
    %p36 = pneg %p30
    %p37 = scmp.eq.s32.totalorder %s7, 1
    %p38 = por %p36, %p37
    %p39 = scmp.ne.s32.totalorder %s31, %s34
    %p40 = scmp.eq.s32.totalorder %s7, 0
    %p41 = por %p39, %p40
    %p42 = scmp.ne.s32.totalorder %s31, %s34
    %p43 = scmp.eq.s32.totalorder %s12, 1
    %p44 = por %p42, %p43
    %p45 = scmp.ne.s32.totalorder %s34, %s35
    %p46 = scmp.eq.s32.totalorder %s12, 0
    %p47 = por %p45, %p46
    %p48 = scmp.ne.s32.totalorder %s34, %s35
    %p49 = scmp.eq.s32.totalorder %s13, 1
    %p50 = por %p48, %p49
    %p52 = scmp.ne.s32.totalorder %s35, %s51
    %p53 = scmp.eq.s32.totalorder %s13, 0
    %p54 = por %p52, %p53
    %s55 = ssub.s32 %s14, %s26
    %s56 = ssub.s32 %s15, %s22
    %s57 = sor.u32 %s55, %s56
    %p58 = scmp.eq.s32.totalorder %s57, 0
    %s60 = sadd.s32 %s59, 1
    %s61 = scalar_select %p58, %s59, %s60
    %p64 = pneg %p58
    %p65 = scmp.eq.s32.totalorder %s7, 1
    %p66 = por %p64, %p65
    %p67 = scmp.ne.s32.totalorder %s59, %s62
    %p68 = scmp.eq.s32.totalorder %s7, 0
    %p69 = por %p67, %p68
    %p70 = scmp.ne.s32.totalorder %s59, %s62
    %p71 = scmp.eq.s32.totalorder %s12, 1
    %p72 = por %p70, %p71
    %p73 = scmp.ne.s32.totalorder %s62, %s63
    %p74 = scmp.eq.s32.totalorder %s12, 0
    %p75 = por %p73, %p74
    %p76 = scmp.ne.s32.totalorder %s62, %s63
    %p77 = scmp.eq.s32.totalorder %s13, 1
    %p78 = por %p76, %p77
    %p80 = scmp.ne.s32.totalorder %s63, %s79
    %p81 = scmp.eq.s32.totalorder %s13, 0
    %p82 = por %p80, %p81
    %p83 = scmp.le.s32.totalorder 1, %s7
    %p84 = scmp.lt.s32.totalorder %s7, 3
    %p85 = pnand %p83, %p84
    %p86 = pneg %p85
    // Predicated region
    $region9: #{global_branch.2} parent=5 // pred_check
      _
    $region10: #{global_branch.2} parent=5 // pred_check_branch
      %88 = sbr.rel (%p85) target = $region12
    $region11: #{global_branch.2} parent=5 // pred_region
      %s89 = ssub.s32 %s7, 1
    $region12: #{global_branch.2} parent=5 // pred_fallthru
      _
    %p90 = scmp.lt.s32.totalorder %s7, 2
    // Predicated region
    $region13: #{global_branch.2} parent=5 // pred_check
      %p91 = pneg %p90
    $region14: #{global_branch.2} parent=5 // pred_check_branch
      %93 = sbr.rel (%p91) target = $region16
    $region15: #{global_branch.2} parent=5 // pred_region
      // Predicated region
      $region17: #{global_branch.2} parent=15 // pred_check
        %p94 = pneg %p41
      $region18: #{global_branch.2} parent=15 // pred_check_branch
        %96 = sbr.rel (%p94) target = $region20
      $region19: #{global_branch.2} parent=15 // pred_region
        %s97 = smul.u32 2, %s15
        %p98 = scmp.lt.s32.totalorder %s14, 1
        %s99 = scalar_select %p98, %s14, 1
        %p100 = scmp.lt.s32.totalorder %s97, 1
        %s101 = scalar_select %p100, %s97, 1
        %s102 = smul.addr %s99, 2
        %s103 = sadd.s32 %s101, %s102
        %s104 = smul.addr %s103, 4
        %s105 = scalar_lea.vmem %s0, %s104
        %s106 = smul.u32 2, %s15
      $region20: #{global_branch.2} parent=15 // pred_fallthru
        _
    $region16: #{global_branch.2} parent=5 // pred_fallthru
      _
    %p107 = scmp.le.s32.totalorder 1, %s7
    %p108 = scmp.lt.s32.totalorder %s7, 3
    %p109 = pnand %p107, %p108
    %p110 = pneg %p109
    // Predicated region
    $region21: #{global_branch.2} parent=5 // pred_check
      _
    $region22: #{global_branch.2} parent=5 // pred_check_branch
      %112 = sbr.rel (%p109) target = $region24
    $region23: #{global_branch.2} parent=5 // pred_region
      %s113 = ssub.s32 %s7, 1
      %s114 = smul.u32 2, %s17
      %p115 = scmp.lt.s32.totalorder %s16, 1
      %s116 = scalar_select %p115, %s16, 1
      %p117 = scmp.lt.s32.totalorder %s114, 1
      %s118 = scalar_select %p117, %s114, 1
      %s119 = smul.addr %s116, 2
      %s120 = sadd.s32 %s118, %s119
      %s121 = smul.addr %s120, 4
      %s122 = scalar_lea.vmem %s0, %s121
      %p123 = pneg %p47
      %p124 = pneg %p44
      %p125 = pneg %p75
      %p126 = pneg %p72
      %s127 = smul.u32 2, %s17
      %p128 = scmp.lt.s32.totalorder %s16, 1
      %s129 = scalar_select %p128, %s16, 1
      %p130 = scmp.lt.s32.totalorder %s127, 1
      %s131 = scalar_select %p130, %s127, 1
      %s132 = smul.addr %s129, 2
      %s133 = sadd.s32 %s131, %s132
      %s134 = scalar_lea.vmem %s1, %s133
      %s135 = smul.u32 2, %s17
      %p136 = scmp.lt.s32.totalorder %s16, 1
      %s137 = scalar_select %p136, %s16, 1
      %p138 = scmp.lt.s32.totalorder %s135, 1
      %s139 = scalar_select %p138, %s135, 1
      %s140 = smul.addr %s137, 2
      %s141 = sadd.s32 %s139, %s140
      %s142 = smul.addr %s141, 4
      %s143 = scalar_lea.vmem %s0, %s142
      %s144 = smul.u32 2, %s17
      %s145 = smul.u32 2, %s17
      %p146 = scmp.lt.s32.totalorder %s16, 1
      %s147 = scalar_select %p146, %s16, 1
      %p148 = scmp.lt.s32.totalorder %s145, 1
      %s149 = scalar_select %p148, %s145, 1
      %s150 = smul.addr %s147, 2
      %s151 = sadd.s32 %s149, %s150
      %s152 = scalar_lea.vmem %s1, %s151
      %s153 = smul.u32 2, %s17
      %v154 = vld [vmem:[%s143] sm:$0xff]
      %v155 = vmax.f32 %v154, 1e-06
      %v156 = vmul.f32 %v155, %v155
      %v157 = vmul.f32 %v156, %v155
      %v159 = vcombine.high %v157, %v157
      %vm161 = vcmask 1043456
      %v162 = vsel %vm161, %v157, 0.0
      %v163 = vrot.slane %v162, 4
      %v164 = vadd.f32 %v162, %v163
      %v165 = vrot.slane %v164, 2
      %v166 = vadd.f32 %v164, %v165
      %v167 = vrot.slane %v166, 1
      %v168 = vadd.f32 %v166, %v167
      %v169 = vsel %vm161, %v159, 0.0
      %v170 = vrot.slane %v169, 4
      %v171 = vadd.f32 %v169, %v170
      %v172 = vrot.slane %v171, 2
      %v173 = vadd.f32 %v171, %v172
      %v174 = vrot.slane %v173, 1
      %v175 = vadd.f32 %v173, %v174
      %v176 = vlog2.pop %v168
      %v177 = vmul.f32 %v176, 0.6931472
      %v178 = vlog2.pop %v175
      %v179 = vmul.f32 %v178, 0.6931472
      %v180 = vmul.f32 %v177, 0.33333334
      %v181 = vmul.f32 %v179, 0.33333334
      %v182 = vmul.f32 %v180, 1.442695
      %v183 = vpow.pop %v182
      %v184 = vmul.f32 %v181, 1.442695
      %v185 = vpow.pop %v184
      %v188 = vcombine.low %v183, %v185
      %v190 = vunpack.c.l.s4 1966171168
      %v191 = vunpack.c.0.s8 %v190
      %v192 = vlaneseq
      %v193 = vshrl.u32 %v192, 7
      %v194 = vsub.s32 %v191, %v193
      %v195 = vrot.slane %v188, %v194
      %v197 = vunpack.c.l.s4 1966171168
      %v198 = vunpack.c.0.s8 %v197
      %v199 = vlaneseq
      %v200 = vshrl.u32 %v199, 7
      %v201 = vsub.s32 %v198, %v200
      %v202 = vrot.slane %v195, %v201
      %v204 = vlaneseq
      %vm205 = vcmp.ge.s32.totalorder %v204, 0
      %vm206 = vcmp.lt.s32.totalorder %v204, 256
      %vm207 = vmand %vm205, %vm206
      %208 = vst.msk [vmem:[%s152] sm:$0x3] %vm207, %v202
      %s209 = smul.u32 2, %s17
      %p210 = scmp.lt.s32.totalorder %s16, 1
      %s211 = scalar_select %p210, %s16, 1
      %p212 = scmp.lt.s32.totalorder %s209, 1
      %s213 = scalar_select %p212, %s209, 1
      %s214 = smul.addr %s211, 2
      %s215 = sadd.s32 %s213, %s214
      %s216 = scalar_lea.vmem %s1, %s215
      // Predicated region
      $region25: #{global_branch.2} parent=23 // pred_check
        %p217 = pneg %p72
      $region26: #{global_branch.2} parent=23 // pred_check_branch
        %219 = sbr.rel (%p217) target = $region28
      $region27: #{global_branch.2} parent=23 // pred_region
        %s220 = smul.u32 2, %s17
      $region28: #{global_branch.2} parent=23 // pred_fallthru
        _
    $region24: #{global_branch.2} parent=5 // pred_fallthru
      _
    %p221 = scmp.le.s32.totalorder 2, %s7
    // Predicated region
    $region29: #{global_branch.2} parent=5 // pred_check
      %p222 = pneg %p221
    $region30: #{global_branch.2} parent=5 // pred_check_branch
      %224 = sbr.rel (%p222) target = $region32
    $region31: #{global_branch.2} parent=5 // pred_region
      %s225 = ssub.s32 %s7, 2
      // Predicated region
      $region33: #{global_branch.2} parent=31 // pred_check
        %p226 = pneg %p78
      $region34: #{global_branch.2} parent=31 // pred_check_branch
        %228 = sbr.rel (%p226) target = $region36
      $region35: #{global_branch.2} parent=31 // pred_region
        %s229 = smul.u32 2, %s19
        %p230 = scmp.lt.s32.totalorder %s18, 1
        %s231 = scalar_select %p230, %s18, 1
        %p232 = scmp.lt.s32.totalorder %s229, 1
        %s233 = scalar_select %p232, %s229, 1
        %s234 = smul.addr %s231, 2
        %s235 = sadd.s32 %s233, %s234
        %s236 = scalar_lea.vmem %s1, %s235
      $region36: #{global_branch.2} parent=31 // pred_fallthru
        _
    $region32: #{global_branch.2} parent=5 // pred_fallthru
      _
  $region6: #{global_branch.2} parent=0 // loop_footer
    %s11 = sadd.s32 1, %s7
  $region7: #{global_branch.2} parent=0 // loop_footer_branch
    %6 = sbr.rel target = $region3
  $region8: #{global_branch.2} parent=0 // loop_exit
    _

// kernel: global_branch.3
$region0: #{global_branch.3}
  #allocation0 [shape = 'u32[]', space=smem, size = 0x4, offset = 0x4, fixed_abs, tag = 'smem constant byte address 0x4 - core index']
  #allocation1 [shape = 'u32[144,128]{1,0:T(1,128)}', space=vmem, size = 0x12000, scoped, tag = 'internal scratch']
  %s0 = inlined_call_operand.vmem [shape: f32[2], index: 0, kind: input, shape index: {}]
  %s1 = inlined_call_operand.vmem [shape: f32[2,4,256], index: 1, kind: input, shape index: {}, may-alias: {1,3}]
  %s2 = inlined_call_operand.vmem [shape: f32[2,1,256], index: 2, kind: input, shape index: {}]
  %s3 = inlined_call_operand.vmem [shape: f32[2,4,256], index: 3, kind: output, shape index: {0}, may-alias: {1,3}]
  %s4 = inlined_call_operand.vmem [shape: f32[2,1,256], index: 4, kind: output, shape index: {1}]
  %5 = xla_tuple %s3, %s4
  %s6 = sld [smem:[#allocation0]]
  $region57: #{global_branch.3} parent=0
    _
  %s8 = ssub.s32 1, %s6
  %s9 = scalar_select 0, %s8, %s6
  $region1: #{global_branch.3} parent=0
    #allocation2 [shape = 'u8[512]{0}', space=smem, size = 0x200, scoped, tag = 'input window, operand 0, single buffered']
    #allocation3 [shape = 's32[2]{0}', space=sflag, size = 0x8, scoped, tag = 'scoped memory for global_branch.3']
    %10 = vsyncpa [#allocation3], 0
    loop: start=0, step=1, limit=4
    $region2: #{global_branch.3} parent=1 // loop_pre_header
      _
    $region3: #{global_branch.3} parent=1 // loop_header
      %s12 = sphi 0, %s16
      %p13 = scmp.ge.s32.totalorder %s12, 4
      %s19 = sphi 0, %s31
      %s20 = sphi 0, %s27
      %s21 = sphi 0, %s19
      %s22 = sphi 0, %s20
      %s23 = sphi 0, %s21
      %s24 = sphi 0, %s22
      %s32 = sphi 0, %s32
      %s34 = sphi 0, %s32
      %s35 = sphi 0, %s34
      %s49 = sphi 0, %s35
      %s57 = sphi 0, %s59
      %s60 = sphi 0, %s57
      %s61 = sphi 0, %s60
      %s77 = sphi 0, %s61
      %s85 = sphi 0, %s87
      %s88 = sphi 0, %s85
      %s89 = sphi 0, %s88
      %s105 = sphi 0, %s89
      %s113 = sphi 0, %s115
      %s116 = sphi 0, %s113
      %s117 = sphi 0, %s116
      %s133 = sphi 0, %s117
      %s141 = sphi 0, %s143
      %s144 = sphi 0, %s141
      %s145 = sphi 0, %s144
      %s161 = sphi 0, %s145
    $region4: #{global_branch.3} parent=1 // loop_header_branch
      %15 = sbr.rel (%p13) target = $region8
    $region5: #{global_branch.3} parent=1 // loop_body
      %s17 = ssub.s32 %s12, 1
      %s18 = ssub.s32 %s12, 2
      %s25 = sadd.s32 1, %s20
      %p26 = scmp.ge.s32.totalorder %s25, 1
      %s27 = scalar_select %p26, 0, %s25
      %s28 = sadd.s32 1, %s19
      %s29 = scalar_select %p26, %s28, %s19
      %p30 = scmp.ge.s32.totalorder %s29, 2
      %s31 = scalar_select %p30, 0, %s29
      %s33 = sadd.s32 %s32, 1
      %p36 = scmp.eq.s32.totalorder %s12, 1
      %p37 = scmp.ne.s32.totalorder %s32, %s34
      %p38 = scmp.eq.s32.totalorder %s12, 0
      %p39 = por %p37, %p38
      %p40 = scmp.ne.s32.totalorder %s32, %s34
      %p41 = scmp.eq.s32.totalorder %s17, 1
      %p42 = por %p40, %p41
      %p43 = scmp.ne.s32.totalorder %s34, %s35
      %p44 = scmp.eq.s32.totalorder %s17, 0
      %p45 = por %p43, %p44
      %p46 = scmp.ne.s32.totalorder %s34, %s35
      %p47 = scmp.eq.s32.totalorder %s18, 1
      %p48 = por %p46, %p47
      %p50 = scmp.ne.s32.totalorder %s35, %s49
      %p51 = scmp.eq.s32.totalorder %s18, 0
      %p52 = por %p50, %p51
      %s53 = ssub.s32 %s19, %s31
      %s54 = ssub.s32 %s20, %s27
      %s55 = sor.u32 %s53, %s54
      %p56 = scmp.eq.s32.totalorder %s55, 0
      %s58 = sadd.s32 %s57, 1
      %s59 = scalar_select %p56, %s57, %s58
      %p62 = pneg %p56
      %p63 = scmp.eq.s32.totalorder %s12, 1
      %p64 = por %p62, %p63
      %p65 = scmp.ne.s32.totalorder %s57, %s60
      %p66 = scmp.eq.s32.totalorder %s12, 0
      %p67 = por %p65, %p66
      %p68 = scmp.ne.s32.totalorder %s57, %s60
      %p69 = scmp.eq.s32.totalorder %s17, 1
      %p70 = por %p68, %p69
      %p71 = scmp.ne.s32.totalorder %s60, %s61
      %p72 = scmp.eq.s32.totalorder %s17, 0
      %p73 = por %p71, %p72
      %p74 = scmp.ne.s32.totalorder %s60, %s61
      %p75 = scmp.eq.s32.totalorder %s18, 1
      %p76 = por %p74, %p75
      %p78 = scmp.ne.s32.totalorder %s61, %s77
      %p79 = scmp.eq.s32.totalorder %s18, 0
      %p80 = por %p78, %p79
      %s81 = ssub.s32 %s19, %s31
      %s82 = ssub.s32 %s20, %s27
      %s83 = sor.u32 %s81, %s82
      %p84 = scmp.eq.s32.totalorder %s83, 0
      %s86 = sadd.s32 %s85, 1
      %s87 = scalar_select %p84, %s85, %s86
      %p90 = pneg %p84
      %p91 = scmp.eq.s32.totalorder %s12, 1
      %p92 = por %p90, %p91
      %p93 = scmp.ne.s32.totalorder %s85, %s88
      %p94 = scmp.eq.s32.totalorder %s12, 0
      %p95 = por %p93, %p94
      %p96 = scmp.ne.s32.totalorder %s85, %s88
      %p97 = scmp.eq.s32.totalorder %s17, 1
      %p98 = por %p96, %p97
      %p99 = scmp.ne.s32.totalorder %s88, %s89
      %p100 = scmp.eq.s32.totalorder %s17, 0
      %p101 = por %p99, %p100
      %p102 = scmp.ne.s32.totalorder %s88, %s89
      %p103 = scmp.eq.s32.totalorder %s18, 1
      %p104 = por %p102, %p103
      %p106 = scmp.ne.s32.totalorder %s89, %s105
      %p107 = scmp.eq.s32.totalorder %s18, 0
      %p108 = por %p106, %p107
      %s109 = ssub.s32 %s19, %s31
      %s110 = ssub.s32 %s20, %s27
      %s111 = sor.u32 %s109, %s110
      %p112 = scmp.eq.s32.totalorder %s111, 0
      %s114 = sadd.s32 %s113, 1
      %s115 = scalar_select %p112, %s113, %s114
      %p118 = pneg %p112
      %p119 = scmp.eq.s32.totalorder %s12, 1
      %p120 = por %p118, %p119
      %p121 = scmp.ne.s32.totalorder %s113, %s116
      %p122 = scmp.eq.s32.totalorder %s12, 0
      %p123 = por %p121, %p122
      %p124 = scmp.ne.s32.totalorder %s113, %s116
      %p125 = scmp.eq.s32.totalorder %s17, 1
      %p126 = por %p124, %p125
      %p127 = scmp.ne.s32.totalorder %s116, %s117
      %p128 = scmp.eq.s32.totalorder %s17, 0
      %p129 = por %p127, %p128
      %p130 = scmp.ne.s32.totalorder %s116, %s117
      %p131 = scmp.eq.s32.totalorder %s18, 1
      %p132 = por %p130, %p131
      %p134 = scmp.ne.s32.totalorder %s117, %s133
      %p135 = scmp.eq.s32.totalorder %s18, 0
      %p136 = por %p134, %p135
      %s137 = ssub.s32 %s19, %s31
      %s138 = ssub.s32 %s20, %s27
      %s139 = sor.u32 %s137, %s138
      %p140 = scmp.eq.s32.totalorder %s139, 0
      %s142 = sadd.s32 %s141, 1
      %s143 = scalar_select %p140, %s141, %s142
      %p146 = pneg %p140
      %p147 = scmp.eq.s32.totalorder %s12, 1
      %p148 = por %p146, %p147
      %p149 = scmp.ne.s32.totalorder %s141, %s144
      %p150 = scmp.eq.s32.totalorder %s12, 0
      %p151 = por %p149, %p150
      %p152 = scmp.ne.s32.totalorder %s141, %s144
      %p153 = scmp.eq.s32.totalorder %s17, 1
      %p154 = por %p152, %p153
      %p155 = scmp.ne.s32.totalorder %s144, %s145
      %p156 = scmp.eq.s32.totalorder %s17, 0
      %p157 = por %p155, %p156
      %p158 = scmp.ne.s32.totalorder %s144, %s145
      %p159 = scmp.eq.s32.totalorder %s18, 1
      %p160 = por %p158, %p159
      %p162 = scmp.ne.s32.totalorder %s145, %s161
      %p163 = scmp.eq.s32.totalorder %s18, 0
      %p164 = por %p162, %p163
      %p165 = scmp.le.s32.totalorder 1, %s12
      %p166 = scmp.lt.s32.totalorder %s12, 3
      %p167 = pnand %p165, %p166
      %p168 = pneg %p167
      // Predicated region
      $region9: #{global_branch.3} parent=5 // pred_check
        _
      $region10: #{global_branch.3} parent=5 // pred_check_branch
        %170 = sbr.rel (%p167) target = $region12
      $region11: #{global_branch.3} parent=5 // pred_region
        %s171 = ssub.s32 %s12, 1
        // Predicated region
        $region13: #{global_branch.3} parent=11 // pred_check
          %p172 = pneg %p45
        $region14: #{global_branch.3} parent=11 // pred_check_branch
          %174 = sbr.rel (%p172) target = $region16
        $region15: #{global_branch.3} parent=11 // pred_region
          %s176 = ssub.s32 16, 16
          %177 = vsyncadd [#allocation3], %s176
          %s179 = sshll.u32 %s0, 4
          %s180 = int_to_ptr.vmem [resolvable:$true] %s179
          %182 = dma.vmem_to_smem %s180, 16, [#allocation2], [#allocation3]
        $region16: #{global_branch.3} parent=11 // pred_fallthru
          _
      $region12: #{global_branch.3} parent=5 // pred_fallthru
        _
      %p183 = scmp.lt.s32.totalorder %s12, 2
      // Predicated region
      $region17: #{global_branch.3} parent=5 // pred_check
        %p184 = pneg %p183
      $region18: #{global_branch.3} parent=5 // pred_check_branch
        %186 = sbr.rel (%p184) target = $region20
      $region19: #{global_branch.3} parent=5 // pred_region
        // Predicated region
        $region21: #{global_branch.3} parent=19 // pred_check
          %p187 = pneg %p67
        $region22: #{global_branch.3} parent=19 // pred_check_branch
          %189 = sbr.rel (%p187) target = $region24
        $region23: #{global_branch.3} parent=19 // pred_region
          %s190 = smul.u32 2, %s20
          %p191 = scmp.lt.s32.totalorder %s19, 1
          %s192 = scalar_select %p191, %s19, 1
          %p193 = scmp.lt.s32.totalorder %s190, 1
          %s194 = scalar_select %p193, %s190, 1
          %s195 = smul.addr %s192, 2
          %s196 = sadd.s32 %s194, %s195
          %s197 = smul.addr %s196, 4
          %s198 = scalar_lea.vmem %s1, %s197
          %s199 = smul.u32 2, %s20
        $region24: #{global_branch.3} parent=19 // pred_fallthru
          _
        // Predicated region
        $region25: #{global_branch.3} parent=19 // pred_check
          %p200 = pneg %p95
        $region26: #{global_branch.3} parent=19 // pred_check_branch
          %202 = sbr.rel (%p200) target = $region28
        $region27: #{global_branch.3} parent=19 // pred_region
          %s203 = smul.u32 2, %s20
          %p204 = scmp.lt.s32.totalorder %s19, 1
          %s205 = scalar_select %p204, %s19, 1
          %p206 = scmp.lt.s32.totalorder %s203, 1
          %s207 = scalar_select %p206, %s203, 1
          %s208 = smul.addr %s205, 2
          %s209 = sadd.s32 %s207, %s208
          %s210 = scalar_lea.vmem %s2, %s209
          %s211 = smul.u32 2, %s20
        $region28: #{global_branch.3} parent=19 // pred_fallthru
          _
      $region20: #{global_branch.3} parent=5 // pred_fallthru
        _
      %p212 = scmp.le.s32.totalorder 1, %s12
      %p213 = scmp.lt.s32.totalorder %s12, 3
      %p214 = pnand %p212, %p213
      %p215 = pneg %p214
      // Predicated region
      $region29: #{global_branch.3} parent=5 // pred_check
        _
      $region30: #{global_branch.3} parent=5 // pred_check_branch
        %217 = sbr.rel (%p214) target = $region32
      $region31: #{global_branch.3} parent=5 // pred_region
        %s218 = ssub.s32 %s12, 1
        // Predicated region
        $region33: #{global_branch.3} parent=31 // pred_check
          %p219 = pneg %p45
        $region34: #{global_branch.3} parent=31 // pred_check_branch
          %221 = sbr.rel (%p219) target = $region36
        $region35: #{global_branch.3} parent=31 // pred_region
          %222 = dma.done [#allocation3], 16
        $region36: #{global_branch.3} parent=31 // pred_fallthru
          _
        %223 = sfence
        %p224 = pneg %p45
        %p225 = pneg %p42
        %s226 = smul.u32 2, %s22
        %p227 = scmp.lt.s32.totalorder %s21, 1
        %s228 = scalar_select %p227, %s21, 1
        %p229 = scmp.lt.s32.totalorder %s226, 1
        %s230 = scalar_select %p229, %s226, 1
        %s231 = smul.addr %s228, 2
        %s232 = sadd.s32 %s230, %s231
        %s233 = smul.addr %s232, 4
        %s234 = scalar_lea.vmem %s1, %s233
        %p235 = pneg %p73
        %p236 = pneg %p70
        %s237 = smul.u32 2, %s22
        %p238 = scmp.lt.s32.totalorder %s21, 1
        %s239 = scalar_select %p238, %s21, 1
        %p240 = scmp.lt.s32.totalorder %s237, 1
        %s241 = scalar_select %p240, %s237, 1
        %s242 = smul.addr %s239, 2
        %s243 = sadd.s32 %s241, %s242
        %s244 = scalar_lea.vmem %s2, %s243
        %p245 = pneg %p101
        %p246 = pneg %p98
        %p247 = pneg %p129
        %p248 = pneg %p126
        %s249 = smul.u32 2, %s22
        %p250 = scmp.lt.s32.totalorder %s21, 1
        %s251 = scalar_select %p250, %s21, 1
        %p252 = scmp.lt.s32.totalorder %s249, 1
        %s253 = scalar_select %p252, %s249, 1
        %s254 = smul.addr %s251, 2
        %s255 = sadd.s32 %s253, %s254
        %s256 = smul.addr %s255, 4
        %s257 = scalar_lea.vmem %s3, %s256
        %p258 = pneg %p157
        %p259 = pneg %p154
        %s260 = smul.u32 2, %s22
        %p261 = scmp.lt.s32.totalorder %s21, 1
        %s262 = scalar_select %p261, %s21, 1
        %p263 = scmp.lt.s32.totalorder %s260, 1
        %s264 = scalar_select %p263, %s260, 1
        %s265 = smul.addr %s262, 2
        %s266 = sadd.s32 %s264, %s265
        %s267 = scalar_lea.vmem %s4, %s266
        %s268 = smul.u32 2, %s22
        %p269 = scmp.lt.s32.totalorder %s21, 1
        %s270 = scalar_select %p269, %s21, 1
        %p271 = scmp.lt.s32.totalorder %s268, 1
        %s272 = scalar_select %p271, %s268, 1
        %s273 = smul.addr %s270, 2
        %s274 = sadd.s32 %s272, %s273
        %s275 = smul.addr %s274, 4
        %s276 = scalar_lea.vmem %s1, %s275
        %s277 = smul.u32 2, %s22
        %s278 = smul.u32 2, %s22
        %p279 = scmp.lt.s32.totalorder %s21, 1
        %s280 = scalar_select %p279, %s21, 1
        %p281 = scmp.lt.s32.totalorder %s278, 1
        %s282 = scalar_select %p281, %s278, 1
        %s283 = smul.addr %s280, 2
        %s284 = sadd.s32 %s282, %s283
        %s285 = scalar_lea.vmem %s2, %s284
        %s286 = smul.u32 2, %s22
        %s287 = smul.u32 2, %s22
        %p288 = scmp.lt.s32.totalorder %s21, 1
        %s289 = scalar_select %p288, %s21, 1
        %p290 = scmp.lt.s32.totalorder %s287, 1
        %s291 = scalar_select %p290, %s287, 1
        %s292 = smul.addr %s289, 2
        %s293 = sadd.s32 %s291, %s292
        %s294 = smul.addr %s293, 4
        %s295 = scalar_lea.vmem %s3, %s294
        %s296 = smul.u32 2, %s22
        %s297 = smul.u32 2, %s22
        %p298 = scmp.lt.s32.totalorder %s21, 1
        %s299 = scalar_select %p298, %s21, 1
        %p300 = scmp.lt.s32.totalorder %s297, 1
        %s301 = scalar_select %p300, %s297, 1
        %s302 = smul.addr %s299, 2
        %s303 = sadd.s32 %s301, %s302
        %s304 = scalar_lea.vmem %s4, %s303
        %s305 = smul.u32 2, %s22
        %s306 = sld [smem:[#allocation2]]
        %s307 = sld [smem:[#allocation2 + $0x1]]
        %v308 = vld [vmem:[%s285] sm:$0x3]
        %v309 = vstv %s306
        %v310 = vmul.f32 %v308, %v309
        %v311 = vstv %s307
        %v312 = vadd.f32 %v310, %v311
        %v313 = vxor.u32 %v312, 2147483648
        %v314 = vmul.f32 %v313, 1.442695
        %v315 = vpow.pop %v314
        %v316 = vadd.f32 %v315, 1.0
        %v317 = vrcp.pop %v316
        %v318 = vmul.f32 1.0, %v317
        %v319 = vlaneseq
        %vm320 = vcmp.ge.s32.totalorder %v319, 0
        %vm321 = vcmp.lt.s32.totalorder %v319, 256
        %vm322 = vmand %vm320, %vm321
        %323 = vst.msk [vmem:[%s304] sm:$0x3] %vm322, %v318
        %v324 = vld [vmem:[%s276] sm:$0xff]
        %v326 = vlaneseq
        %v327 = vshrl.u32 %v326, 7
        %v328 = vsub.s32 0, %v327
        %v329 = vrot.slane %v318, %v328
        %v330 = vlaneseq
        %v331 = vshrl.u32 %v330, 7
        %v332 = vsub.s32 1, %v331
        %v333 = vrot.slane %v318, %v332
        %v334 = vcombine.low %v329, %v333
        %v336 = vmul.f32 %v324, %v334
        %337 = vst [vmem:[%s295] sm:$0xff] %v336
        %s338 = smul.u32 2, %s22
        %p339 = scmp.lt.s32.totalorder %s21, 1
        %s340 = scalar_select %p339, %s21, 1
        %p341 = scmp.lt.s32.totalorder %s338, 1
        %s342 = scalar_select %p341, %s338, 1
        %s343 = smul.addr %s340, 2
        %s344 = sadd.s32 %s342, %s343
        %s345 = smul.addr %s344, 4
        %s346 = scalar_lea.vmem %s3, %s345
        %s347 = smul.u32 2, %s22
        %p348 = scmp.lt.s32.totalorder %s21, 1
        %s349 = scalar_select %p348, %s21, 1
        %p350 = scmp.lt.s32.totalorder %s347, 1
        %s351 = scalar_select %p350, %s347, 1
        %s352 = smul.addr %s349, 2
        %s353 = sadd.s32 %s351, %s352
        %s354 = scalar_lea.vmem %s4, %s353
        // Predicated region
        $region37: #{global_branch.3} parent=31 // pred_check
          %p355 = pneg %p126
        $region38: #{global_branch.3} parent=31 // pred_check_branch
          %357 = sbr.rel (%p355) target = $region40
        $region39: #{global_branch.3} parent=31 // pred_region
          %s358 = smul.u32 2, %s22
        $region40: #{global_branch.3} parent=31 // pred_fallthru
          _
        // Predicated region
        $region41: #{global_branch.3} parent=31 // pred_check
          %p359 = pneg %p154
        $region42: #{global_branch.3} parent=31 // pred_check_branch
          %361 = sbr.rel (%p359) target = $region44
        $region43: #{global_branch.3} parent=31 // pred_region
          %s362 = smul.u32 2, %s22
        $region44: #{global_branch.3} parent=31 // pred_fallthru
          _
      $region32: #{global_branch.3} parent=5 // pred_fallthru
        _
      %p363 = scmp.le.s32.totalorder 2, %s12
      // Predicated region
      $region45: #{global_branch.3} parent=5 // pred_check
        %p364 = pneg %p363
      $region46: #{global_branch.3} parent=5 // pred_check_branch
        %366 = sbr.rel (%p364) target = $region48
      $region47: #{global_branch.3} parent=5 // pred_region
        %s367 = ssub.s32 %s12, 2
        // Predicated region
        $region49: #{global_branch.3} parent=47 // pred_check
          %p368 = pneg %p132
        $region50: #{global_branch.3} parent=47 // pred_check_branch
          %370 = sbr.rel (%p368) target = $region52
        $region51: #{global_branch.3} parent=47 // pred_region
          %s371 = smul.u32 2, %s24
          %p372 = scmp.lt.s32.totalorder %s23, 1
          %s373 = scalar_select %p372, %s23, 1
          %p374 = scmp.lt.s32.totalorder %s371, 1
          %s375 = scalar_select %p374, %s371, 1
          %s376 = smul.addr %s373, 2
          %s377 = sadd.s32 %s375, %s376
          %s378 = smul.addr %s377, 4
          %s379 = scalar_lea.vmem %s3, %s378
        $region52: #{global_branch.3} parent=47 // pred_fallthru
          _
        // Predicated region
        $region53: #{global_branch.3} parent=47 // pred_check
          %p380 = pneg %p160
        $region54: #{global_branch.3} parent=47 // pred_check_branch
          %382 = sbr.rel (%p380) target = $region56
        $region55: #{global_branch.3} parent=47 // pred_region
          %s383 = smul.u32 2, %s24
          %p384 = scmp.lt.s32.totalorder %s23, 1
          %s385 = scalar_select %p384, %s23, 1
          %p386 = scmp.lt.s32.totalorder %s383, 1
          %s387 = scalar_select %p386, %s383, 1
          %s388 = smul.addr %s385, 2
          %s389 = sadd.s32 %s387, %s388
          %s390 = scalar_lea.vmem %s4, %s389
        $region56: #{global_branch.3} parent=47 // pred_fallthru
          _
      $region48: #{global_branch.3} parent=5 // pred_fallthru
        _
    $region6: #{global_branch.3} parent=1 // loop_footer
      %s16 = sadd.s32 1, %s12
    $region7: #{global_branch.3} parent=1 // loop_footer_branch
      %11 = sbr.rel target = $region3
    $region8: #{global_branch.3} parent=1 // loop_exit
      _
    %391 = vsyncpa [#allocation3], 1
    %s392 = scalar_lea.sflag [#allocation3], 1
    %393 = vsyncpa %s392, 1

</llo_original>
